<compile_context>
chip_gen: v5e
topology: v5e:2x2
jax: 0.10.0
libtpu: 0.0.40
codegen_flags: <defaults>
</compile_context>

<pallas_src>
import functools

import jax
import jax.numpy as jnp
from jax.experimental import pallas as pl
from jax.experimental.pallas import tpu as pltpu


# ----------------------------- kernels ------------------------------------ #

def _linear_relu_kernel_2d(x_ref, w_ref, b_ref, o_ref, *, compute_dtype):
    """Single-K-block kernel: o = relu(x @ w + b), written exactly once."""
    x = x_ref[...].astype(compute_dtype)
    w = w_ref[...].astype(compute_dtype)
    acc = jnp.dot(x, w, preferred_element_type=jnp.float32)
    o_ref[...] = jnp.maximum(acc + b_ref[...], 0.0).astype(o_ref.dtype)


def _linear_relu_kernel_3d(x_ref, w_ref, b_ref, o_ref, *, compute_dtype):
    """K-tiled kernel: accumulate straight into the K-resident f32 output."""
    k = pl.program_id(2)
    x = x_ref[...].astype(compute_dtype)
    w = w_ref[...].astype(compute_dtype)
    partial = jnp.dot(x, w, preferred_element_type=jnp.float32)

    @pl.when(k == 0)
    def _init():
        o_ref[...] = partial

    @pl.when(k > 0)
    def _accum():
        o_ref[...] += partial

    @pl.when(k == pl.num_programs(2) - 1)
    def _finalize():
        o_ref[...] = jnp.maximum(o_ref[...] + b_ref[...], 0.0)


# --------------------------- tiling helpers -------------------------------- #

def _round_up(x, m):
    return (x + m - 1) // m * m


def _pick_tile(dim, granularity, cap):
    """Largest multiple of `granularity` that divides `dim` and is <= cap."""
    cap = max(granularity, min(cap, dim))
    cap = (cap // granularity) * granularity
    for t in range(cap, granularity - 1, -granularity):
        if dim % t == 0:
            return t
    return granularity  # unreachable: granularity divides dim by construction


_SINGLE_BLOCK_K = 2048  # 128-rounded K up to this stays one block (no K axis)


def _device_defaults():
    """Per-generation tile caps and scoped-VMEM limits (conservative on v7x)."""
    kind = ""
    try:
        kind = jax.devices()[0].device_kind.lower()
    except Exception:
        pass
    if "v6" in kind:      # v6e: 128 MiB physical VMEM -> bigger output tiles
        return dict(max_tm=512, max_tn=1024, max_tk=_SINGLE_BLOCK_K,
                    vmem_budget=48 << 20, vmem_limit=64 << 20)
    if "v5" in kind:      # v5e/v5p: mem-bound generation, 128 MiB VMEM
        return dict(max_tm=512, max_tn=512, max_tk=_SINGLE_BLOCK_K,
                    vmem_budget=32 << 20, vmem_limit=48 << 20)
    # v7x / unknown: 64 MiB physical VMEM per core -> stay conservative.
    return dict(max_tm=512, max_tn=512, max_tk=_SINGLE_BLOCK_K,
                vmem_budget=20 << 20, vmem_limit=32 << 20)


def _select_tiles(Mp, Np, Kp, x_bytes, w_bytes, *, vmem_budget,
                  max_tm, max_tn, max_tk):
    """Tiles that divide the (alignment-padded) dims and fit the VMEM budget."""

    def footprint(tm, tn, tk):
        # double-buffered inputs + double-buffered f32 output + bias
        return (2 * tm * tk * x_bytes + 2 * tk * tn * w_bytes
                + 2 * tm * tn * 4 + 2 * tn * 4)

    tm_cap, tn_cap, tk_cap = max_tm, max_tn, max_tk
    tm = tn = tk = None
    for _ in range(64):  # caps only shrink -> bounded
        tm = _pick_tile(Mp, 8, tm_cap)
        tn = _pick_tile(Np, 128, tn_cap)
        tk = Kp if Kp <= tk_cap else _pick_tile(Kp, 128, tk_cap)
        if footprint(tm, tn, tk) <= vmem_budget:
            return tm, tn, tk
        if tk_cap > 512:
            tk_cap //= 2
        elif tn_cap > 128:
            tn_cap //= 2
        elif tm_cap > 128:
            tm_cap //= 2
        elif tk_cap > 128:
            tk_cap //= 2
        else:
            break
    return tm, tn, tk


# ------------------------------ wrapper ------------------------------------ #

def _my_linear_pallas(x, weight, bias, *, compute_dtype=jnp.bfloat16,
                      max_tk=_SINGLE_BLOCK_K):
    M, K = x.shape
    Kw, N = weight.shape
    assert Kw == K and bias.shape == (N,)

    # Pad only to hardware alignment, never to tile multiples.
    Mp, Kp, Np = _round_up(M, 8), _round_up(K, 128), _round_up(N, 128)

    # Only touch the inputs when padding is actually required; fold the bf16
    # cast into that same pass.  Already-aligned inputs go in as-is (f32) and
    # are cast per-tile inside the kernel.
    if (Mp, Kp) != (M, K):
        x_in = jnp.pad(x, ((0, Mp - M), (0, Kp - K))).astype(compute_dtype)
    else:
        x_in = x
    if (Kp, Np) != (K, N):
        w_in = jnp.pad(weight, ((0, Kp - K), (0, Np - N))).astype(compute_dtype)
    else:
        w_in = weight
    b_in = bias if Np == N else jnp.pad(bias, (0, Np - N))
    b_in = b_in.astype(jnp.float32).reshape(1, Np)

    dev = _device_defaults()
    x_bytes = jnp.dtype(x_in.dtype).itemsize
    w_bytes = jnp.dtype(w_in.dtype).itemsize
    tm, tn, tk = _select_tiles(
        Mp, Np, Kp, x_bytes, w_bytes,
        vmem_budget=dev["vmem_budget"], max_tm=dev["max_tm"],
        max_tn=dev["max_tn"], max_tk=min(max_tk, dev["max_tk"]))
    single_k = (tk == Kp)

    cost = pl.CostEstimate(
        flops=2 * Mp * Np * Kp,
        transcendentals=0,
        bytes_accessed=(Mp * Kp * x_bytes + Kp * Np * w_bytes
                        + Np * 4 + Mp * Np * 4),
    )

    # TODO(synk): on v7x, if a shape yields a single parallel block, halve tm
    # (or use pl.core_map) so both TensorCores get work.
    if single_k:
        kernel = functools.partial(_linear_relu_kernel_2d,
                                   compute_dtype=compute_dtype)
        out_p = pl.pallas_call(
            kernel,
            out_shape=jax.ShapeDtypeStruct((Mp, Np), jnp.float32),
            grid_spec=pl.GridSpec(
                grid=(Mp // tm, Np // tn),
                in_specs=[
                    pl.BlockSpec((tm, Kp), lambda i, j: (i, 0)),
                    pl.BlockSpec((Kp, tn), lambda i, j: (0, j)),
                    pl.BlockSpec((1, tn), lambda i, j: (0, j)),
                ],
                out_specs=pl.BlockSpec((tm, tn), lambda i, j: (i, j)),
            ),
            compiler_params=pltpu.CompilerParams(
                dimension_semantics=("parallel", "parallel"),
                vmem_limit_bytes=dev["vmem_limit"],
            ),
            cost_estimate=cost,
        )(x_in, w_in, b_in)
    else:
        kernel = functools.partial(_linear_relu_kernel_3d,
                                   compute_dtype=compute_dtype)
        out_p = pl.pallas_call(
            kernel,
            out_shape=jax.ShapeDtypeStruct((Mp, Np), jnp.float32),
            grid_spec=pl.GridSpec(
                grid=(Mp // tm, Np // tn, Kp // tk),   # reduction axis last
                in_specs=[
                    pl.BlockSpec((tm, tk), lambda i, j, k: (i, k)),
                    pl.BlockSpec((tk, tn), lambda i, j, k: (k, j)),
                    pl.BlockSpec((1, tn), lambda i, j, k: (0, j)),
                ],
                out_specs=pl.BlockSpec((tm, tn), lambda i, j, k: (i, j)),
            ),
            compiler_params=pltpu.CompilerParams(
                dimension_semantics=("parallel", "parallel", "arbitrary"),
                vmem_limit_bytes=dev["vmem_limit"],
            ),
            cost_estimate=cost,
        )(x_in, w_in, b_in)

    if (Mp, Np) != (M, N):
        out_p = out_p[:M, :N]
    return out_p


# Below these, the pallas_call fixed cost dominates: use the fused-XLA path.
_PALLAS_FLOP_THRESHOLD = 1 << 27     # ~134 MFLOP: < ~1 us of MXU work
_PALLAS_BYTES_THRESHOLD = 1 << 23    # 8 MiB of f32 operand traffic


def my_linear_forward(x, weight, bias, *, force_pallas=False,
                      compute_dtype=jnp.bfloat16, max_tk=_SINGLE_BLOCK_K):
    """Pallas equivalent of MyLinear.forward: relu(x @ weight + bias)."""
    M, K = x.shape
    _, N = weight.shape
    flops = 2 * M * K * N
    approx_bytes = 4 * (M * K + K * N + N + M * N)
    if (not force_pallas and flops < _PALLAS_FLOP_THRESHOLD
            and approx_bytes < _PALLAS_BYTES_THRESHOLD):
        # Tiny layer: XLA fuses relu(x@w+b); a custom kernel is pure overhead.
        return jnp.maximum(jnp.dot(x, weight) + bias, 0.0)
    return _my_linear_pallas(x, weight, bias, compute_dtype=compute_dtype,
                             max_tk=max_tk)


# ------------------------------- tests ------------------------------------- #

if __name__ == "__main__":
    key = jax.random.PRNGKey(0)
    k1, k2, k3, k4, k5, k6 = jax.random.split(key, 6)

    def ref_f32(x, w, b):
        y = jnp.dot(x, w, precision=jax.lax.Precision.HIGHEST) + b
        return jnp.maximum(y, 0.0)

    def ref_bf16(x, w, b):
        y = jnp.dot(x.astype(jnp.bfloat16), w.astype(jnp.bfloat16),
                    preferred_element_type=jnp.float32) + b
        return jnp.maximum(y, 0.0)

    # --- Test 1: the module's own shape, MyLinear(5, 3) on a batch of 8. ---
    # Takes the fused-XLA fallback (far too small for a custom kernel).
    x_s = jax.random.normal(k1, (8, 5), dtype=jnp.float32)
    w_s = jax.random.normal(k2, (5, 3), dtype=jnp.float32)   # torch.randn analogue
    b_s = jax.random.normal(k3, (3,), dtype=jnp.float32)     # torch.randn analogue
    out1 = jax.block_until_ready(my_linear_forward(x_s, w_s, b_s))
    assert out1.shape == (8, 3)
    assert jnp.allclose(out1, jnp.maximum(x_s @ w_s + b_s, 0.0),
                        atol=1e-5, rtol=1e-5)

    # --- Test 2: ragged original-layer shape forced through Pallas in f32. ---
    # Exercises pad-to-(8,128), the single-K-block 2-D kernel, and f32 fidelity.
    x_r = jax.random.normal(k4, (300, 5), dtype=jnp.float32)
    out2 = jax.block_until_ready(
        my_linear_forward(x_r, w_s, b_s, force_pallas=True,
                          compute_dtype=jnp.float32))
    assert out2.shape == (300, 3)
    assert jnp.allclose(out2, ref_f32(x_r, w_s, b_s), atol=1e-3, rtol=1e-3)

    # --- Test 3: realistically sized layer through the natural Pallas path. ---
    # K (=384) fits in one block -> 2-D parallel grid, no accumulator, no K pad.
    B, IN, UNITS = 1024, 384, 384
    x = jax.random.normal(k4, (B, IN), dtype=jnp.float32)
    w = jax.random.normal(k5, (IN, UNITS), dtype=jnp.float32)
    b = jax.random.normal(k6, (UNITS,), dtype=jnp.float32)
    out3 = jax.block_until_ready(my_linear_forward(x, w, b))
    assert out3.shape == (B, UNITS)
    assert jnp.allclose(out3, ref_bf16(x, w, b), atol=2e-2, rtol=2e-2)

    # --- Test 4: force a K loop (tk cap 128 -> 3 K steps) to exercise the ---
    # accumulate-into-output 3-D kernel (init / accumulate / bias+ReLU finalize).
    x4 = jax.random.normal(k5, (256, 384), dtype=jnp.float32)
    w4 = jax.random.normal(k6, (384, 256), dtype=jnp.float32)
    b4 = jax.random.normal(k3, (256,), dtype=jnp.float32)
    out4 = jax.block_until_ready(
        my_linear_forward(x4, w4, b4, force_pallas=True, max_tk=128))
    assert out4.shape == (256, 256)
    assert jnp.allclose(out4, ref_bf16(x4, w4, b4), atol=2e-2, rtol=2e-2)

    print("KERNEL_OK")
</pallas_src>

<mosaic_0001>
module attributes {stable_mosaic.version = 11 : i64} {
  func.func @_linear_relu_kernel_2d(%arg0: i32, %arg1: i32, %arg2: memref<304x128xf32, #tpu.memory_space<vmem>>, %arg3: memref<128x128xf32, #tpu.memory_space<vmem>>, %arg4: memref<1x128xf32, #tpu.memory_space<vmem>>, %arg5: memref<304x128xf32, #tpu.memory_space<vmem>>) attributes {dimension_semantics = [#tpu.dimension_semantics<parallel>, #tpu.dimension_semantics<parallel>], iteration_bounds = array<i64: 1, 1>, scalar_prefetch = 0 : i64, scratch_operands = 0 : i64, tpu.core_type = #tpu.core_type<tc>, window_params = [{transform_indices = @transform_0, window_bounds = array<i64: 304, 128>}, {transform_indices = @transform_1, window_bounds = array<i64: 128, 128>}, {transform_indices = @transform_2, window_bounds = array<i64: 1, 128>}, {transform_indices = @transform_3, window_bounds = array<i64: 304, 128>}]} {
    %c0 = arith.constant 0 : index
    %c0_0 = arith.constant 0 : index
    %0 = vector.load %arg2[%c0, %c0_0] : memref<304x128xf32, #tpu.memory_space<vmem>>, vector<304x128xf32>
    %c0_1 = arith.constant 0 : index
    %c0_2 = arith.constant 0 : index
    %1 = vector.load %arg3[%c0_1, %c0_2] : memref<128x128xf32, #tpu.memory_space<vmem>>, vector<128x128xf32>
    %cst = arith.constant dense<0.000000e+00> : vector<304x128xf32>
    %2 = tpu.matmul %0, %1, %cst {dimension_numbers = #tpu.dot_dimension_numbers<[1], [0], [0], [1], [0, 0, 1, 1], [], []>} : vector<304x128xf32>, vector<128x128xf32>, vector<304x128xf32> -> vector<304x128xf32>
    %c0_3 = arith.constant 0 : index
    %c0_4 = arith.constant 0 : index
    %3 = vector.load %arg4[%c0_3, %c0_4] : memref<1x128xf32, #tpu.memory_space<vmem>>, vector<1x128xf32>
    %4 = vector.broadcast %3 : vector<1x128xf32> to vector<304x128xf32>
    %5 = arith.addf %2, %4 : vector<304x128xf32>
    %cst_5 = arith.constant 0.000000e+00 : f32
    %6 = vector.broadcast %cst_5 : f32 to vector<304x128xf32>
    %7 = arith.maximumf %5, %6 : vector<304x128xf32>
    %c0_6 = arith.constant 0 : index
    %c0_7 = arith.constant 0 : index
    %8 = vector.load %arg5[%c0_6, %c0_7] : memref<304x128xf32, #tpu.memory_space<vmem>>, vector<304x128xf32>
    tpu.vector_store %arg5[%c0_6, %c0_7], %7 {strides = array<i32>} : memref<304x128xf32, #tpu.memory_space<vmem>>, vector<304x128xf32>,
    return
  }
  func.func @transform_0(%arg0: i32, %arg1: i32) -> (i32, i32) {
    %c0_i32 = arith.constant 0 : i32
    %c0_i32_0 = arith.constant 0 : i32
    return %arg0, %c0_i32 : i32, i32
  }
  func.func @transform_1(%arg0: i32, %arg1: i32) -> (i32, i32) {
    %c0_i32 = arith.constant 0 : i32
    %c0_i32_0 = arith.constant 0 : i32
    return %c0_i32, %arg1 : i32, i32
  }
  func.func @transform_2(%arg0: i32, %arg1: i32) -> (i32, i32) {
    %c0_i32 = arith.constant 0 : i32
    %c0_i32_0 = arith.constant 0 : i32
    return %c0_i32, %arg1 : i32, i32
  }
  func.func @transform_3(%arg0: i32, %arg1: i32) -> (i32, i32) {
    %c0_i32 = arith.constant 0 : i32
    return %arg0, %arg1 : i32, i32
  }
}

</mosaic_0001>

<llo_original>
// kernel: tpu_custom_call.1
$region0: #{tpu_custom_call.1}
  #allocation0 [shape = 'u32[]', space=smem, size = 0x4, offset = 0x4, fixed_abs, tag = 'smem constant byte address 0x4 - core index']
  #allocation1 [shape = 'u32[72,128]{1,0:T(1,128)}', space=vmem, size = 0x9000, scoped, tag = 'internal scratch']
  %s0 = inlined_call_operand.hbm [shape: f32[304,128], index: 0, kind: input, shape index: {}]
  %s1 = inlined_call_operand.hbm [shape: f32[128,128], index: 1, kind: input, shape index: {}]
  %s2 = inlined_call_operand.vmem [shape: f32[1,128], index: 2, kind: input, shape index: {}]
  %s3 = inlined_call_operand.hbm [shape: f32[304,128], index: 3, kind: output, shape index: {}]
  %s4 = sld [smem:[#allocation0]]
  $region30: #{tpu_custom_call.1} parent=0
    _
  %s6 = ssub.s32 1, %s4
  %s7 = scalar_select 0, %s6, %s4
  $region1: #{tpu_custom_call.1} parent=0
    #allocation2 [shape = 'u8[155648]{0}', space=vmem, size = 0x26000, scoped, tag = 'input window, operand 0, single buffered']
    #allocation3 [shape = 's32[1]{0}', space=sflag, size = 0x4, scoped, tag = 'scoped memory for tpu_custom_call.1']
    #allocation4 [shape = 's32[1]{0}', space=sflag, size = 0x4, scoped, tag = 'scoped memory for tpu_custom_call.1']
    #allocation5 [shape = 'u8[65536]{0}', space=vmem, size = 0x10000, scoped, tag = 'input window, operand 1, single buffered']
    #allocation6 [shape = 's32[1]{0}', space=sflag, size = 0x4, scoped, tag = 'scoped memory for tpu_custom_call.1']
    #allocation7 [shape = 'u8[155648]{0}', space=vmem, size = 0x26000, scoped, tag = 'output window, operand 0, single buffered']
    %8 = vsyncpa [#allocation3], 0
    %9 = vsyncpa [#allocation6], 0
    %10 = vsyncpa [#allocation4], 0
    // Predicated region
    $region2: #{tpu_custom_call.1} parent=1 // pred_check
      _
    $region3: #{tpu_custom_call.1} parent=1 // pred_check_branch
      %12 = sbr.rel (0) target = $region5
    $region4: #{tpu_custom_call.1} parent=1 // pred_region
      %14 = vsyncadd [#allocation3], 0
      %s15 = sshll.u32 %s0, 4
      %s16 = int_to_ptr.hbm [resolvable:$true] %s15
      %s17 = sshll.u32 [#allocation2], 4
      %s18 = int_to_ptr.vmem [resolvable:$true] %s17
      %23 = dma.hbm_to_vmem [thread:$0]  %s16, 4864, %s18, [#allocation3], 128, 128, 8
    $region5: #{tpu_custom_call.1} parent=1 // pred_fallthru
      _
    // Predicated region
    $region6: #{tpu_custom_call.1} parent=1 // pred_check
      _
    $region7: #{tpu_custom_call.1} parent=1 // pred_check_branch
      %25 = sbr.rel (0) target = $region9
    $region8: #{tpu_custom_call.1} parent=1 // pred_region
      %27 = vsyncadd [#allocation6], 0
      %s28 = sshll.u32 %s1, 4
      %s29 = int_to_ptr.hbm [resolvable:$true] %s28
      %s30 = sshll.u32 [#allocation5], 4
      %s31 = int_to_ptr.vmem [resolvable:$true] %s30
      %36 = dma.hbm_to_vmem [thread:$0]  %s29, 2048, %s31, [#allocation6], 128, 128, 8
    $region9: #{tpu_custom_call.1} parent=1 // pred_fallthru
      _
    // Predicated region
    $region10: #{tpu_custom_call.1} parent=1 // pred_check
      _
    $region11: #{tpu_custom_call.1} parent=1 // pred_check_branch
      %38 = sbr.rel (0) target = $region13
    $region12: #{tpu_custom_call.1} parent=1 // pred_region
      _
    $region13: #{tpu_custom_call.1} parent=1 // pred_fallthru
      _
    // Predicated region
    $region14: #{tpu_custom_call.1} parent=1 // pred_check
      _
    $region15: #{tpu_custom_call.1} parent=1 // pred_check_branch
      %40 = sbr.rel (0) target = $region17
    $region16: #{tpu_custom_call.1} parent=1 // pred_region
      %42 = dma.done [#allocation3], 4864
    $region17: #{tpu_custom_call.1} parent=1 // pred_fallthru
      _
    // Predicated region
    $region18: #{tpu_custom_call.1} parent=1 // pred_check
      _
    $region19: #{tpu_custom_call.1} parent=1 // pred_check_branch
      %44 = sbr.rel (0) target = $region21
    $region20: #{tpu_custom_call.1} parent=1 // pred_region
      %46 = dma.done [#allocation6], 2048
    $region21: #{tpu_custom_call.1} parent=1 // pred_fallthru
      _
    %v47 = vld [vmem:[#allocation2] sm:$0xff]
    %v48 = vld [vmem:[#allocation2 + $0x8] sm:$0xff]
    %v49 = vld [vmem:[#allocation2 + $0x10] sm:$0xff]
    %v50 = vld [vmem:[#allocation2 + $0x18] sm:$0xff]
    %v51 = vld [vmem:[#allocation2 + $0x20] sm:$0xff]
    %v52 = vld [vmem:[#allocation2 + $0x28] sm:$0xff]
    %v53 = vld [vmem:[#allocation2 + $0x30] sm:$0xff]
    %v54 = vld [vmem:[#allocation2 + $0x38] sm:$0xff]
    %v55 = vld [vmem:[#allocation2 + $0x40] sm:$0xff]
    %v56 = vld [vmem:[#allocation2 + $0x48] sm:$0xff]
    %v57 = vld [vmem:[#allocation2 + $0x50] sm:$0xff]
    %v58 = vld [vmem:[#allocation2 + $0x58] sm:$0xff]
    %v59 = vld [vmem:[#allocation2 + $0x60] sm:$0xff]
    %v60 = vld [vmem:[#allocation2 + $0x68] sm:$0xff]
    %v61 = vld [vmem:[#allocation2 + $0x70] sm:$0xff]
    %v62 = vld [vmem:[#allocation2 + $0x78] sm:$0xff]
    %v63 = vld [vmem:[#allocation2 + $0x80] sm:$0xff]
    %v64 = vld [vmem:[#allocation2 + $0x88] sm:$0xff]
    %v65 = vld [vmem:[#allocation2 + $0x90] sm:$0xff]
    %v66 = vld [vmem:[#allocation2 + $0x98] sm:$0xff]
    %v67 = vld [vmem:[#allocation2 + $0xa0] sm:$0xff]
    %v68 = vld [vmem:[#allocation2 + $0xa8] sm:$0xff]
    %v69 = vld [vmem:[#allocation2 + $0xb0] sm:$0xff]
    %v70 = vld [vmem:[#allocation2 + $0xb8] sm:$0xff]
    %v71 = vld [vmem:[#allocation2 + $0xc0] sm:$0xff]
    %v72 = vld [vmem:[#allocation2 + $0xc8] sm:$0xff]
    %v73 = vld [vmem:[#allocation2 + $0xd0] sm:$0xff]
    %v74 = vld [vmem:[#allocation2 + $0xd8] sm:$0xff]
    %v75 = vld [vmem:[#allocation2 + $0xe0] sm:$0xff]
    %v76 = vld [vmem:[#allocation2 + $0xe8] sm:$0xff]
    %v77 = vld [vmem:[#allocation2 + $0xf0] sm:$0xff]
    %v78 = vld [vmem:[#allocation2 + $0xf8] sm:$0xff]
    %v79 = vld [vmem:[#allocation2 + $0x100] sm:$0xff]
    %v80 = vld [vmem:[#allocation2 + $0x108] sm:$0xff]
    %v81 = vld [vmem:[#allocation2 + $0x110] sm:$0xff]
    %v82 = vld [vmem:[#allocation2 + $0x118] sm:$0xff]
    %v83 = vld [vmem:[#allocation2 + $0x120] sm:$0xff]
    %v84 = vld [vmem:[#allocation2 + $0x128] sm:$0xff]
    %v85 = vld [vmem:[#allocation5] sm:$0xff]
    %v86 = vld [vmem:[#allocation5 + $0x8] sm:$0xff]
    %v87 = vld [vmem:[#allocation5 + $0x10] sm:$0xff]
    %v88 = vld [vmem:[#allocation5 + $0x18] sm:$0xff]
    %v89 = vld [vmem:[#allocation5 + $0x20] sm:$0xff]
    %v90 = vld [vmem:[#allocation5 + $0x28] sm:$0xff]
    %v91 = vld [vmem:[#allocation5 + $0x30] sm:$0xff]
    %v92 = vld [vmem:[#allocation5 + $0x38] sm:$0xff]
    %v93 = vld [vmem:[#allocation5 + $0x40] sm:$0xff]
    %v94 = vld [vmem:[#allocation5 + $0x48] sm:$0xff]
    %v95 = vld [vmem:[#allocation5 + $0x50] sm:$0xff]
    %v96 = vld [vmem:[#allocation5 + $0x58] sm:$0xff]
    %v97 = vld [vmem:[#allocation5 + $0x60] sm:$0xff]
    %v98 = vld [vmem:[#allocation5 + $0x68] sm:$0xff]
    %v99 = vld [vmem:[#allocation5 + $0x70] sm:$0xff]
    %v100 = vld [vmem:[#allocation5 + $0x78] sm:$0xff]
    %v101 = vld [vmem:[%s2] sm:$0x1]
    %v103 = vperm.slane %v101, 0
    %105 = vmatpush.msra.mxu0 %v100
    %106 = vmatpush.msra.mxu0 %v99
    %107 = vmatpush.msra.mxu0 %v98
    %108 = vmatpush.msra.mxu0 %v97
    %109 = vmatpush.msra.mxu0 %v96
    %110 = vmatpush.msra.mxu0 %v95
    %111 = vmatpush.msra.mxu0 %v94
    %112 = vmatpush.msra.mxu0 %v93
    %113 = vmatpush.msra.mxu0 %v92
    %114 = vmatpush.msra.mxu0 %v91
    %115 = vmatpush.msra.mxu0 %v90
    %116 = vmatpush.msra.mxu0 %v89
    %117 = vmatpush.msra.mxu0 %v88
    %118 = vmatpush.msra.mxu0 %v87
    %119 = vmatpush.msra.mxu0 %v86
    %120 = vmatpush.msra.mxu0 %v85
    %121 = vmatmul.f32.gmra.mxu0 %v47
    %v122 = vpop.f32.mrf.mxu0
    %v123 = vadd.f32 %v103, %v122
    %124 = vmatmul.f32.gmra.mxu0 %v48
    %v125 = vpop.f32.mrf.mxu0
    %v126 = vadd.f32 %v103, %v125
    %127 = vmatmul.f32.gmra.mxu0 %v49
    %v128 = vpop.f32.mrf.mxu0
    %v129 = vadd.f32 %v103, %v128
    %130 = vmatmul.f32.gmra.mxu0 %v50
    %v131 = vpop.f32.mrf.mxu0
    %v132 = vadd.f32 %v103, %v131
    %133 = vmatmul.f32.gmra.mxu0 %v51
    %v134 = vpop.f32.mrf.mxu0
    %v135 = vadd.f32 %v103, %v134
    %136 = vmatmul.f32.gmra.mxu0 %v52
    %v137 = vpop.f32.mrf.mxu0
    %v138 = vadd.f32 %v103, %v137
    %139 = vmatmul.f32.gmra.mxu0 %v53
    %v140 = vpop.f32.mrf.mxu0
    %v141 = vadd.f32 %v103, %v140
    %142 = vmatmul.f32.gmra.mxu0 %v54
    %v143 = vpop.f32.mrf.mxu0
    %v144 = vadd.f32 %v103, %v143
    %145 = vmatmul.f32.gmra.mxu0 %v55
    %v146 = vpop.f32.mrf.mxu0
    %v147 = vadd.f32 %v103, %v146
    %148 = vmatmul.f32.gmra.mxu0 %v56
    %v149 = vpop.f32.mrf.mxu0
    %v150 = vadd.f32 %v103, %v149
    %151 = vmatmul.f32.gmra.mxu0 %v57
    %v152 = vpop.f32.mrf.mxu0
    %v153 = vadd.f32 %v103, %v152
    %154 = vmatmul.f32.gmra.mxu0 %v58
    %v155 = vpop.f32.mrf.mxu0
    %v156 = vadd.f32 %v103, %v155
    %157 = vmatmul.f32.gmra.mxu0 %v59
    %v158 = vpop.f32.mrf.mxu0
    %v159 = vadd.f32 %v103, %v158
    %160 = vmatmul.f32.gmra.mxu0 %v60
    %v161 = vpop.f32.mrf.mxu0
    %v162 = vadd.f32 %v103, %v161
    %163 = vmatmul.f32.gmra.mxu0 %v61
    %v164 = vpop.f32.mrf.mxu0
    %v165 = vadd.f32 %v103, %v164
    %166 = vmatmul.f32.gmra.mxu0 %v62
    %v167 = vpop.f32.mrf.mxu0
    %v168 = vadd.f32 %v103, %v167
    %169 = vmatmul.f32.gmra.mxu0 %v63
    %v170 = vpop.f32.mrf.mxu0
    %v171 = vadd.f32 %v103, %v170
    %172 = vmatmul.f32.gmra.mxu0 %v64
    %v173 = vpop.f32.mrf.mxu0
    %v174 = vadd.f32 %v103, %v173
    %175 = vmatmul.f32.gmra.mxu0 %v65
    %v176 = vpop.f32.mrf.mxu0
    %v177 = vadd.f32 %v103, %v176
    %178 = vmatmul.f32.gmra.mxu0 %v66
    %v179 = vpop.f32.mrf.mxu0
    %v180 = vadd.f32 %v103, %v179
    %181 = vmatmul.f32.gmra.mxu0 %v67
    %v182 = vpop.f32.mrf.mxu0
    %v183 = vadd.f32 %v103, %v182
    %184 = vmatmul.f32.gmra.mxu0 %v68
    %v185 = vpop.f32.mrf.mxu0
    %v186 = vadd.f32 %v103, %v185
    %187 = vmatmul.f32.gmra.mxu0 %v69
    %v188 = vpop.f32.mrf.mxu0
    %v189 = vadd.f32 %v103, %v188
    %190 = vmatmul.f32.gmra.mxu0 %v70
    %v191 = vpop.f32.mrf.mxu0
    %v192 = vadd.f32 %v103, %v191
    %193 = vmatmul.f32.gmra.mxu0 %v71
    %v194 = vpop.f32.mrf.mxu0
    %v195 = vadd.f32 %v103, %v194
    %196 = vmatmul.f32.gmra.mxu0 %v72
    %v197 = vpop.f32.mrf.mxu0
    %v198 = vadd.f32 %v103, %v197
    %199 = vmatmul.f32.gmra.mxu0 %v73
    %v200 = vpop.f32.mrf.mxu0
    %v201 = vadd.f32 %v103, %v200
    %202 = vmatmul.f32.gmra.mxu0 %v74
    %v203 = vpop.f32.mrf.mxu0
    %v204 = vadd.f32 %v103, %v203
    %205 = vmatmul.f32.gmra.mxu0 %v75
    %v206 = vpop.f32.mrf.mxu0
    %v207 = vadd.f32 %v103, %v206
    %208 = vmatmul.f32.gmra.mxu0 %v76
    %v209 = vpop.f32.mrf.mxu0
    %v210 = vadd.f32 %v103, %v209
    %211 = vmatmul.f32.gmra.mxu0 %v77
    %v212 = vpop.f32.mrf.mxu0
    %v213 = vadd.f32 %v103, %v212
    %214 = vmatmul.f32.gmra.mxu0 %v78
    %v215 = vpop.f32.mrf.mxu0
    %v216 = vadd.f32 %v103, %v215
    %217 = vmatmul.f32.gmra.mxu0 %v79
    %v218 = vpop.f32.mrf.mxu0
    %v219 = vadd.f32 %v103, %v218
    %220 = vmatmul.f32.gmra.mxu0 %v80
    %v221 = vpop.f32.mrf.mxu0
    %v222 = vadd.f32 %v103, %v221
    %223 = vmatmul.f32.gmra.mxu0 %v81
    %v224 = vpop.f32.mrf.mxu0
    %v225 = vadd.f32 %v103, %v224
    %226 = vmatmul.f32.gmra.mxu0 %v82
    %v227 = vpop.f32.mrf.mxu0
    %v228 = vadd.f32 %v103, %v227
    %229 = vmatmul.f32.gmra.mxu0 %v83
    %v230 = vpop.f32.mrf.mxu0
    %v231 = vadd.f32 %v103, %v230
    %232 = vmatmul.f32.gmra.mxu0 %v84
    %v233 = vpop.f32.mrf.mxu0
    %v234 = vadd.f32 %v103, %v233
    %235 = vdwg.mxu0
    %v236 = vmax.f32 %v123, 0.0
    %v237 = vmax.f32 %v126, 0.0
    %v238 = vmax.f32 %v129, 0.0
    %v239 = vmax.f32 %v132, 0.0
    %v240 = vmax.f32 %v135, 0.0
    %v241 = vmax.f32 %v138, 0.0
    %v242 = vmax.f32 %v141, 0.0
    %v243 = vmax.f32 %v144, 0.0
    %v244 = vmax.f32 %v147, 0.0
    %v245 = vmax.f32 %v150, 0.0
    %v246 = vmax.f32 %v153, 0.0
    %v247 = vmax.f32 %v156, 0.0
    %v248 = vmax.f32 %v159, 0.0
    %v249 = vmax.f32 %v162, 0.0
    %v250 = vmax.f32 %v165, 0.0
    %v251 = vmax.f32 %v168, 0.0
    %v252 = vmax.f32 %v171, 0.0
    %v253 = vmax.f32 %v174, 0.0
    %v254 = vmax.f32 %v177, 0.0
    %v255 = vmax.f32 %v180, 0.0
    %v256 = vmax.f32 %v183, 0.0
    %v257 = vmax.f32 %v186, 0.0
    %v258 = vmax.f32 %v189, 0.0
    %v259 = vmax.f32 %v192, 0.0
    %v260 = vmax.f32 %v195, 0.0
    %v261 = vmax.f32 %v198, 0.0
    %v262 = vmax.f32 %v201, 0.0
    %v263 = vmax.f32 %v204, 0.0
    %v264 = vmax.f32 %v207, 0.0
    %v265 = vmax.f32 %v210, 0.0
    %v266 = vmax.f32 %v213, 0.0
    %v267 = vmax.f32 %v216, 0.0
    %v268 = vmax.f32 %v219, 0.0
    %v269 = vmax.f32 %v222, 0.0
    %v270 = vmax.f32 %v225, 0.0
    %v271 = vmax.f32 %v228, 0.0
    %v272 = vmax.f32 %v231, 0.0
    %v273 = vmax.f32 %v234, 0.0
    %274 = vst [vmem:[#allocation7] sm:$0xff] %v236
    %275 = vst [vmem:[#allocation7 + $0x8] sm:$0xff] %v237
    %276 = vst [vmem:[#allocation7 + $0x10] sm:$0xff] %v238
    %277 = vst [vmem:[#allocation7 + $0x18] sm:$0xff] %v239
    %278 = vst [vmem:[#allocation7 + $0x20] sm:$0xff] %v240
    %279 = vst [vmem:[#allocation7 + $0x28] sm:$0xff] %v241
    %280 = vst [vmem:[#allocation7 + $0x30] sm:$0xff] %v242
    %281 = vst [vmem:[#allocation7 + $0x38] sm:$0xff] %v243
    %282 = vst [vmem:[#allocation7 + $0x40] sm:$0xff] %v244
    %283 = vst [vmem:[#allocation7 + $0x48] sm:$0xff] %v245
    %284 = vst [vmem:[#allocation7 + $0x50] sm:$0xff] %v246
    %285 = vst [vmem:[#allocation7 + $0x58] sm:$0xff] %v247
    %286 = vst [vmem:[#allocation7 + $0x60] sm:$0xff] %v248
    %287 = vst [vmem:[#allocation7 + $0x68] sm:$0xff] %v249
    %288 = vst [vmem:[#allocation7 + $0x70] sm:$0xff] %v250
    %289 = vst [vmem:[#allocation7 + $0x78] sm:$0xff] %v251
    %290 = vst [vmem:[#allocation7 + $0x80] sm:$0xff] %v252
    %291 = vst [vmem:[#allocation7 + $0x88] sm:$0xff] %v253
    %292 = vst [vmem:[#allocation7 + $0x90] sm:$0xff] %v254
    %293 = vst [vmem:[#allocation7 + $0x98] sm:$0xff] %v255
    %294 = vst [vmem:[#allocation7 + $0xa0] sm:$0xff] %v256
    %295 = vst [vmem:[#allocation7 + $0xa8] sm:$0xff] %v257
    %296 = vst [vmem:[#allocation7 + $0xb0] sm:$0xff] %v258
    %297 = vst [vmem:[#allocation7 + $0xb8] sm:$0xff] %v259
    %298 = vst [vmem:[#allocation7 + $0xc0] sm:$0xff] %v260
    %299 = vst [vmem:[#allocation7 + $0xc8] sm:$0xff] %v261
    %300 = vst [vmem:[#allocation7 + $0xd0] sm:$0xff] %v262
    %301 = vst [vmem:[#allocation7 + $0xd8] sm:$0xff] %v263
    %302 = vst [vmem:[#allocation7 + $0xe0] sm:$0xff] %v264
    %303 = vst [vmem:[#allocation7 + $0xe8] sm:$0xff] %v265
    %304 = vst [vmem:[#allocation7 + $0xf0] sm:$0xff] %v266
    %305 = vst [vmem:[#allocation7 + $0xf8] sm:$0xff] %v267
    %306 = vst [vmem:[#allocation7 + $0x100] sm:$0xff] %v268
    %307 = vst [vmem:[#allocation7 + $0x108] sm:$0xff] %v269
    %308 = vst [vmem:[#allocation7 + $0x110] sm:$0xff] %v270
    %309 = vst [vmem:[#allocation7 + $0x118] sm:$0xff] %v271
    %310 = vst [vmem:[#allocation7 + $0x120] sm:$0xff] %v272
    %311 = vst [vmem:[#allocation7 + $0x128] sm:$0xff] %v273
    // Predicated region
    $region22: #{tpu_custom_call.1} parent=1 // pred_check
      _
    $region23: #{tpu_custom_call.1} parent=1 // pred_check_branch
      %313 = sbr.rel (0) target = $region25
    $region24: #{tpu_custom_call.1} parent=1 // pred_region
      %315 = vsyncadd [#allocation4], 0
      %s316 = sshll.u32 [#allocation7], 4
      %s317 = int_to_ptr.vmem [resolvable:$true] %s316
      %s318 = sshll.u32 %s3, 4
      %s319 = int_to_ptr.hbm [resolvable:$true] %s318
      %324 = dma.vmem_to_hbm [thread:$0]  %s317, 4864, %s319, [#allocation4], 128, 128, 8
    $region25: #{tpu_custom_call.1} parent=1 // pred_fallthru
      _
    // Predicated region
    $region26: #{tpu_custom_call.1} parent=1 // pred_check
      _
    $region27: #{tpu_custom_call.1} parent=1 // pred_check_branch
      %326 = sbr.rel (0) target = $region29
    $region28: #{tpu_custom_call.1} parent=1 // pred_region
      %328 = dma.done [#allocation4], 4864
    $region29: #{tpu_custom_call.1} parent=1 // pred_fallthru
      _
    %329 = vsyncpa [#allocation3], 1
    %330 = vsyncpa [#allocation6], 1
    %331 = vsyncpa [#allocation4], 1

</llo_original>
